<compile_context>
chip_gen: v7x
topology: tpu7x:2x2x1
jax: 0.10.0
libtpu: 0.0.40
codegen_flags: <defaults>
</compile_context>

<pallas_src>
import functools

import jax
import jax.numpy as jnp
from jax.experimental import pallas as pl
from jax.experimental.pallas import tpu as pltpu


# ----------------------------------------------------------------------------
# Fused kernel: all views' encoders (block-diagonal weights) + softplus
# evidence + chained Dempster-Shafer combination, lane-dense 128-wide blocks.
# ----------------------------------------------------------------------------
def fused_llm_rc_kernel(x_ref, w1_ref, b1_ref, w2_ref, b2_ref, out_ref, *,
                        num_views, lane_block, inv_c, use_evl, n_avg):
    # Linear1 (BN already folded into w1/b1 by the wrapper) + ReLU.
    h = jnp.dot(x_ref[...], w1_ref[...], preferred_element_type=jnp.float32)
    h = jnp.maximum(h + b1_ref[...], 0.0)
    # dropout == identity at inference.
    # Linear2 (block-diagonal across views, per-view blocks lane-padded to 128).
    o = jnp.dot(h.astype(w2_ref.dtype), w2_ref[...],
                preferred_element_type=jnp.float32) + b2_ref[...]
    ev = jax.nn.softplus(o)                                  # (TB, V*CL) f32

    CL = lane_block
    if use_evl:
        alphas = ev + 1.0                                    # per-view alphas
        comb = alphas[:, 0:CL]
        for v in range(1, num_views):
            a_v = alphas[:, v * CL:(v + 1) * CL]             # 128-aligned slice
            # Closed form of DS_Combin_two: the (1 - conflict) denominator
            # cancels exactly =>  alpha_a = (a-1)*(b-1)/C + a + b - 1.
            comb = (comb - 1.0) * (a_v - 1.0) * inv_c + comb + a_v - 1.0
        slab = jnp.concatenate([alphas, comb], axis=1)
    else:
        # Reference "Simple": average of the first three views' evidence.
        comb = ev[:, 0:CL]
        for v in range(1, n_avg):
            comb = comb + ev[:, v * CL:(v + 1) * CL]
        comb = comb * (1.0 / float(n_avg))
        slab = jnp.concatenate([ev, comb], axis=1)

    out_ref[...] = slab          # single unmasked full-tile store


# ----------------------------------------------------------------------------
# Wrapper: BN folding, block-diag packing, 128-lane padding, one pallas_call.
# ----------------------------------------------------------------------------
def _round_up(x, m):
    return ((x + m - 1) // m) * m


def _block_diag(mats):
    rows = sum(m.shape[0] for m in mats)
    cols = sum(m.shape[1] for m in mats)
    out = jnp.zeros((rows, cols), mats[0].dtype)
    r = c = 0
    for m in mats:
        out = out.at[r:r + m.shape[0], c:c + m.shape[1]].set(m)
        r += m.shape[0]
        c += m.shape[1]
    return out


def llm_rc_forward(x_list, params_list, num_classes, use_evl=True,
                   block_b=512, use_bf16=None):
    V = len(x_list)
    B = x_list[0].shape[0]
    C = int(num_classes)
    H = params_list[0]["w1"].shape[1]
    CL = _round_up(C, 128)            # lane-dense per-view class block width

    # ---- fold BN (eval) into Linear1; lane-pad each view's class block ----
    w1f, b1f, w2s, b2s = [], [], [], []
    for p in params_list:
        scale = p["gamma"] * jax.lax.rsqrt(p["var"] + 1e-5)       # (1, H)
        w1f.append(p["w1"] * scale)                               # (F_v, H)
        b1f.append((p["b1"] - p["mean"]) * scale + p["beta"])     # (1, H)
        w2s.append(jnp.pad(p["w2"], ((0, 0), (0, CL - C))))       # (H, CL)
        b2s.append(jnp.pad(p["b2"], ((0, 0), (0, CL - C))))       # (1, CL)
    W1 = _block_diag(w1f)                    # (F_total, V*H)
    B1 = jnp.concatenate(b1f, axis=1)        # (1, V*H)
    W2 = _block_diag(w2s)                    # (V*H, V*CL)
    B2 = jnp.concatenate(b2s, axis=1)        # (1, V*CL)
    X = jnp.concatenate(x_list, axis=1).astype(jnp.float32)       # (B, F_total)
    F_total = X.shape[1]

    # ---- 128-pad both contraction dims so the MXU sees aligned full tiles ----
    FP = _round_up(F_total, 128)
    HP = _round_up(V * H, 128)
    X = jnp.pad(X, ((0, 0), (0, FP - F_total)))
    W1 = jnp.pad(W1, ((0, FP - F_total), (0, HP - V * H)))
    B1 = jnp.pad(B1, ((0, 0), (0, HP - V * H)))
    W2 = jnp.pad(W2, ((0, HP - V * H), (0, 0)))

    # ---- grid-aware batch tiling: minimal padded rows, >=2 steps for v7x ----
    steps = int(pl.cdiv(B, block_b))
    if B >= 16:
        steps = max(steps, 2)     # v7x has 2 TensorCores; give each a step
    TB = _round_up(int(pl.cdiv(B, steps)), 8)
    Bp = steps * TB
    if Bp != B:
        X = jnp.pad(X, ((0, Bp - B), (0, 0)))

    # ---- optional bf16 MXU operands once dims are non-trivial ----
    if use_bf16 is None:
        use_bf16 = (FP >= 512 or HP >= 512)
    if use_bf16:
        X = X.astype(jnp.bfloat16)
        W1 = W1.astype(jnp.bfloat16)
        W2 = W2.astype(jnp.bfloat16)
    itemsize = 2 if use_bf16 else 4

    OW = (V + 1) * CL
    kernel = functools.partial(fused_llm_rc_kernel, num_views=V,
                               lane_block=CL, inv_c=1.0 / float(C),
                               use_evl=use_evl, n_avg=min(3, V))
    cost = pl.CostEstimate(
        flops=2 * Bp * (FP * HP + HP * V * CL) + 10 * Bp * V * CL,
        transcendentals=2 * Bp * V * CL,
        bytes_accessed=(Bp * FP * itemsize + FP * HP * itemsize + HP * 4
                        + HP * V * CL * itemsize + V * CL * 4 + Bp * OW * 4))

    def _run(weight_mode):
        wkw = {} if weight_mode is None else {"pipeline_mode": weight_mode}
        weight_bufs = 2 if weight_mode is None else 1
        vmem_need = (2 * TB * FP * itemsize + 2 * TB * OW * 4
                     + weight_bufs * (FP * HP * itemsize + HP * 4
                                      + HP * V * CL * itemsize + V * CL * 4))
        vmem_limit = int(min(64 * 1024 * 1024,
                             max(4 * vmem_need + (1 << 20), 8 * 1024 * 1024)))
        out = pl.pallas_call(
            kernel,
            out_shape=jax.ShapeDtypeStruct((Bp, OW), jnp.float32),
            grid_spec=pltpu.PrefetchScalarGridSpec(
                num_scalar_prefetch=0,
                grid=(steps,),
                in_specs=[
                    pl.BlockSpec((TB, FP), lambda i: (i, 0)),
                    pl.BlockSpec((FP, HP), lambda i: (0, 0), **wkw),
                    pl.BlockSpec((1, HP), lambda i: (0, 0), **wkw),
                    pl.BlockSpec((HP, V * CL), lambda i: (0, 0), **wkw),
                    pl.BlockSpec((1, V * CL), lambda i: (0, 0), **wkw),
                ],
                out_specs=pl.BlockSpec((TB, OW), lambda i: (i, 0)),
            ),
            compiler_params=pltpu.CompilerParams(
                dimension_semantics=("parallel",),
                vmem_limit_bytes=vmem_limit),
            cost_estimate=cost,
        )(X, W1, B1, W2, B2)
        return jax.block_until_ready(out)

    try:
        out = _run(pl.Buffered(1))   # single-buffer the constant-index weights
    except Exception:
        out = _run(None)             # fallback: default double-buffering

    out = out[:B]
    alphas = [out[:, v * CL:v * CL + C] for v in range(V)]
    combined = out[:, V * CL:V * CL + C]
    if V == 1:
        return tuple(alphas + alphas)      # reference early-return semantics
    return tuple(alphas + [combined])


# ----------------------------------------------------------------------------
# Deterministic synthetic parameters + pure-JAX reference for validation
# ----------------------------------------------------------------------------
def init_encoder_params(key, nfeat, nhid, ncla):
    k = jax.random.split(key, 8)
    lim1 = 1.0 / jnp.sqrt(nfeat)
    lim2 = 1.0 / jnp.sqrt(nhid)
    return dict(
        w1=jax.random.uniform(k[0], (nfeat, nhid), jnp.float32, -lim1, lim1),
        b1=jax.random.uniform(k[1], (1, nhid), jnp.float32, -lim1, lim1),
        gamma=jax.random.uniform(k[2], (1, nhid), jnp.float32, 0.5, 1.5),
        beta=jax.random.uniform(k[3], (1, nhid), jnp.float32, -0.1, 0.1),
        mean=jax.random.uniform(k[4], (1, nhid), jnp.float32, -0.1, 0.1),
        var=jax.random.uniform(k[5], (1, nhid), jnp.float32, 0.5, 1.5),
        w2=jax.random.uniform(k[6], (nhid, ncla), jnp.float32, -lim2, lim2),
        b2=jax.random.uniform(k[7], (1, ncla), jnp.float32, -lim2, lim2),
    )


def _ref_forward(x_list, params_list, num_classes, use_evl=True):
    outs = []
    for x, p in zip(x_list, params_list):
        h = x @ p["w1"] + p["b1"]
        h = (h - p["mean"]) * jax.lax.rsqrt(p["var"] + 1e-5) * p["gamma"] + p["beta"]
        h = jnp.maximum(h, 0.0)
        o = jax.nn.softplus(h @ p["w2"] + p["b2"])
        outs.append(o + 1.0 if use_evl else o)
    if len(outs) == 1:
        return tuple(outs + outs)
    if use_evl:
        def ds_two(a1, a2):
            Cn = float(num_classes)
            S1 = jnp.sum(a1, 1, keepdims=True)
            S2 = jnp.sum(a2, 1, keepdims=True)
            b1, b2 = (a1 - 1.0) / S1, (a2 - 1.0) / S2
            u1, u2 = Cn / S1, Cn / S2
            conflict = (jnp.sum(b1, 1, keepdims=True) * jnp.sum(b2, 1, keepdims=True)
                        - jnp.sum(b1 * b2, 1, keepdims=True))
            b_a = (b1 * b2 + b1 * u2 + b2 * u1) / (1.0 - conflict)
            u_a = u1 * u2 / (1.0 - conflict)
            return b_a * (Cn / u_a) + 1.0
        comb = ds_two(outs[0], outs[1])
        for i in range(2, len(outs)):
            comb = ds_two(comb, outs[i])
    else:
        comb = (outs[0] + outs[1] + outs[2]) / 3.0
    return tuple(outs + [comb])


if __name__ == "__main__":
    # Small synthetic multi-view problem: 3 views, batch=8, hid=32, classes=8
    batch = 8
    view_feats = {0: 16, 1: 24, 2: 32}
    hid = 32
    num_classes = 8

    key = jax.random.PRNGKey(0)
    keys = jax.random.split(key, 2 * len(view_feats))

    x_list, params_list = [], []
    for i, (vid, dim) in enumerate(sorted(view_feats.items())):
        x_list.append(jax.random.normal(keys[2 * i], (batch, dim), jnp.float32))
        params_list.append(init_encoder_params(keys[2 * i + 1], dim, hid, num_classes))

    result = llm_rc_forward(x_list, params_list, num_classes, use_evl=True)
    result = jax.block_until_ready(result)

    # validate against the straight (un-fused, un-simplified) math
    expected = _ref_forward(x_list, params_list, num_classes, use_evl=True)

    assert len(result) == 4
    for r, e in zip(result, expected):
        assert r.shape == (batch, num_classes)
        assert bool(jnp.all(r >= 1.0))
        assert bool(jnp.allclose(r, e, rtol=1e-3, atol=1e-3))

    print("KERNEL_OK")
</pallas_src>

<mosaic_0001>
module attributes {stable_mosaic.version = 11 : i64} {
  func.func @fused_llm_rc_kernel(%arg0: i32, %arg1: memref<8x128xf32, #tpu.memory_space<vmem>>, %arg2: memref<128x128xf32, #tpu.memory_space<vmem>>, %arg3: memref<1x128xf32, #tpu.memory_space<vmem>>, %arg4: memref<128x384xf32, #tpu.memory_space<vmem>>, %arg5: memref<1x384xf32, #tpu.memory_space<vmem>>, %arg6: memref<8x512xf32, #tpu.memory_space<vmem>>) attributes {dimension_semantics = [#tpu.dimension_semantics<parallel>], iteration_bounds = array<i64: 1>, scalar_prefetch = 0 : i64, scratch_operands = 0 : i64, tpu.core_type = #tpu.core_type<tc>, window_params = [{transform_indices = @transform_0, window_bounds = array<i64: 8, 128>}, {pipeline_mode = #tpu.pipeline_mode<synchronous>, transform_indices = @transform_1, window_bounds = array<i64: 128, 128>}, {pipeline_mode = #tpu.pipeline_mode<synchronous>, transform_indices = @transform_2, window_bounds = array<i64: 1, 128>}, {pipeline_mode = #tpu.pipeline_mode<synchronous>, transform_indices = @transform_3, window_bounds = array<i64: 128, 384>}, {pipeline_mode = #tpu.pipeline_mode<synchronous>, transform_indices = @transform_4, window_bounds = array<i64: 1, 384>}, {transform_indices = @transform_5, window_bounds = array<i64: 8, 512>}]} {
    %c0 = arith.constant 0 : index
    %c0_0 = arith.constant 0 : index
    %0 = vector.load %arg1[%c0, %c0_0] : memref<8x128xf32, #tpu.memory_space<vmem>>, vector<8x128xf32>
    %c0_1 = arith.constant 0 : index
    %c0_2 = arith.constant 0 : index
    %1 = vector.load %arg2[%c0_1, %c0_2] : memref<128x128xf32, #tpu.memory_space<vmem>>, vector<128x128xf32>
    %cst = arith.constant dense<0.000000e+00> : vector<8x128xf32>
    %2 = tpu.matmul %0, %1, %cst {dimension_numbers = #tpu.dot_dimension_numbers<[1], [0], [0], [1], [0, 0, 1, 1], [], []>} : vector<8x128xf32>, vector<128x128xf32>, vector<8x128xf32> -> vector<8x128xf32>
    %c0_3 = arith.constant 0 : index
    %c0_4 = arith.constant 0 : index
    %3 = vector.load %arg3[%c0_3, %c0_4] : memref<1x128xf32, #tpu.memory_space<vmem>>, vector<1x128xf32>
    %4 = vector.broadcast %3 : vector<1x128xf32> to vector<8x128xf32>
    %5 = arith.addf %2, %4 : vector<8x128xf32>
    %cst_5 = arith.constant 0.000000e+00 : f32
    %6 = vector.broadcast %cst_5 : f32 to vector<8x128xf32>
    %7 = arith.maximumf %5, %6 : vector<8x128xf32>
    %c0_6 = arith.constant 0 : index
    %c0_7 = arith.constant 0 : index
    %8 = vector.load %arg4[%c0_6, %c0_7] : memref<128x384xf32, #tpu.memory_space<vmem>>, vector<128x384xf32>
    %cst_8 = arith.constant dense<0.000000e+00> : vector<8x384xf32>
    %9 = tpu.matmul %7, %8, %cst_8 {dimension_numbers = #tpu.dot_dimension_numbers<[1], [0], [0], [1], [0, 0, 1, 1], [], []>} : vector<8x128xf32>, vector<128x384xf32>, vector<8x384xf32> -> vector<8x384xf32>
    %c0_9 = arith.constant 0 : index
    %c0_10 = arith.constant 0 : index
    %10 = vector.load %arg5[%c0_9, %c0_10] : memref<1x384xf32, #tpu.memory_space<vmem>>, vector<1x384xf32>
    %11 = vector.broadcast %10 : vector<1x384xf32> to vector<8x384xf32>
    %12 = arith.addf %9, %11 : vector<8x384xf32>
    %cst_11 = arith.constant 0.000000e+00 : f32
    %13 = vector.broadcast %cst_11 : f32 to vector<8x384xf32>
    %14 = arith.maximumf %12, %13 : vector<8x384xf32>
    %15 = vector.broadcast %cst_11 : f32 to vector<8x384xf32>
    %16 = arith.subf %12, %15 : vector<8x384xf32>
    %17 = arith.cmpf one, %16, %16 : vector<8x384xf32>
    %18 = vector.broadcast %cst_11 : f32 to vector<8x384xf32>
    %19 = arith.addf %12, %18 : vector<8x384xf32>
    %20 = math.absf %16 : vector<8x384xf32>
    %cst_12 = arith.constant 0.000000e+00 : f32
    %21 = vector.broadcast %cst_12 : f32 to vector<8x384xf32>
    %22 = arith.subf %21, %20 : vector<8x384xf32>
    %23 = math.exp %22 : vector<8x384xf32>
    %24 = math.log1p %23 : vector<8x384xf32>
    %25 = arith.addf %14, %24 : vector<8x384xf32>
    %26 = arith.select %17, %19, %25 : vector<8x384xi1>, vector<8x384xf32>
    %cst_13 = arith.constant 1.000000e+00 : f32
    %27 = vector.broadcast %cst_13 : f32 to vector<8x384xf32>
    %28 = arith.addf %26, %27 : vector<8x384xf32>
    %29 = vector.extract_strided_slice %28 {offsets = [0, 0], sizes = [8, 128], strides = [1, 1]} : vector<8x384xf32> to vector<8x128xf32>
    %30 = vector.extract_strided_slice %28 {offsets = [0, 128], sizes = [8, 128], strides = [1, 1]} : vector<8x384xf32> to vector<8x128xf32>
    %cst_14 = arith.constant 1.000000e+00 : f32
    %31 = vector.broadcast %cst_14 : f32 to vector<8x128xf32>
    %32 = arith.subf %29, %31 : vector<8x128xf32>
    %cst_15 = arith.constant 1.000000e+00 : f32
    %33 = vector.broadcast %cst_15 : f32 to vector<8x128xf32>
    %34 = arith.subf %30, %33 : vector<8x128xf32>
    %35 = arith.mulf %32, %34 : vector<8x128xf32>
    %cst_16 = arith.constant 1.250000e-01 : f32
    %36 = vector.broadcast %cst_16 : f32 to vector<8x128xf32>
    %37 = arith.mulf %35, %36 : vector<8x128xf32>
    %38 = arith.addf %37, %29 : vector<8x128xf32>
    %39 = arith.addf %38, %30 : vector<8x128xf32>
    %cst_17 = arith.constant 1.000000e+00 : f32
    %40 = vector.broadcast %cst_17 : f32 to vector<8x128xf32>
    %41 = arith.subf %39, %40 : vector<8x128xf32>
    %42 = vector.extract_strided_slice %28 {offsets = [0, 256], sizes = [8, 128], strides = [1, 1]} : vector<8x384xf32> to vector<8x128xf32>
    %cst_18 = arith.constant 1.000000e+00 : f32
    %43 = vector.broadcast %cst_18 : f32 to vector<8x128xf32>
    %44 = arith.subf %41, %43 : vector<8x128xf32>
    %cst_19 = arith.constant 1.000000e+00 : f32
    %45 = vector.broadcast %cst_19 : f32 to vector<8x128xf32>
    %46 = arith.subf %42, %45 : vector<8x128xf32>
    %47 = arith.mulf %44, %46 : vector<8x128xf32>
    %cst_20 = arith.constant 1.250000e-01 : f32
    %48 = vector.broadcast %cst_20 : f32 to vector<8x128xf32>
    %49 = arith.mulf %47, %48 : vector<8x128xf32>
    %50 = arith.addf %49, %41 : vector<8x128xf32>
    %51 = arith.addf %50, %42 : vector<8x128xf32>
    %cst_21 = arith.constant 1.000000e+00 : f32
    %52 = vector.broadcast %cst_21 : f32 to vector<8x128xf32>
    %53 = arith.subf %51, %52 : vector<8x128xf32>
    %54 = tpu.concatenate %28, %53 in 1 : vector<8x384xf32>, vector<8x128xf32> -> vector<8x512xf32>
    %c0_22 = arith.constant 0 : index
    %c0_23 = arith.constant 0 : index
    %55 = vector.load %arg6[%c0_22, %c0_23] : memref<8x512xf32, #tpu.memory_space<vmem>>, vector<8x512xf32>
    tpu.vector_store %arg6[%c0_22, %c0_23], %54 {strides = array<i32>} : memref<8x512xf32, #tpu.memory_space<vmem>>, vector<8x512xf32>,
    return
  }
  func.func @transform_0(%arg0: i32) -> (i32, i32) {
    %c0_i32 = arith.constant 0 : i32
    %c0_i32_0 = arith.constant 0 : i32
    return %arg0, %c0_i32 : i32, i32
  }
  func.func @transform_1(%arg0: i32) -> (i32, i32) {
    %c0_i32 = arith.constant 0 : i32
    %c0_i32_0 = arith.constant 0 : i32
    %c0_i32_1 = arith.constant 0 : i32
    return %c0_i32, %c0_i32_0 : i32, i32
  }
  func.func @transform_2(%arg0: i32) -> (i32, i32) {
    %c0_i32 = arith.constant 0 : i32
    %c0_i32_0 = arith.constant 0 : i32
    %c0_i32_1 = arith.constant 0 : i32
    return %c0_i32, %c0_i32_0 : i32, i32
  }
  func.func @transform_3(%arg0: i32) -> (i32, i32) {
    %c0_i32 = arith.constant 0 : i32
    %c0_i32_0 = arith.constant 0 : i32
    %c0_i32_1 = arith.constant 0 : i32
    return %c0_i32, %c0_i32_0 : i32, i32
  }
  func.func @transform_4(%arg0: i32) -> (i32, i32) {
    %c0_i32 = arith.constant 0 : i32
    %c0_i32_0 = arith.constant 0 : i32
    %c0_i32_1 = arith.constant 0 : i32
    return %c0_i32, %c0_i32_0 : i32, i32
  }
  func.func @transform_5(%arg0: i32) -> (i32, i32) {
    %c0_i32 = arith.constant 0 : i32
    %c0_i32_0 = arith.constant 0 : i32
    return %arg0, %c0_i32 : i32, i32
  }
}

module attributes {stable_mosaic.version = 11 : i64} {
  func.func @fused_llm_rc_kernel(%arg0: i32, %arg1: memref<8x128xf32, #tpu.memory_space<vmem>>, %arg2: memref<128x128xf32, #tpu.memory_space<vmem>>, %arg3: memref<1x128xf32, #tpu.memory_space<vmem>>, %arg4: memref<128x384xf32, #tpu.memory_space<vmem>>, %arg5: memref<1x384xf32, #tpu.memory_space<vmem>>, %arg6: memref<8x512xf32, #tpu.memory_space<vmem>>) attributes {dimension_semantics = [#tpu.dimension_semantics<parallel>], iteration_bounds = array<i64: 1>, scalar_prefetch = 0 : i64, scratch_operands = 0 : i64, tpu.core_type = #tpu.core_type<tc>, window_params = [{transform_indices = @transform_0, window_bounds = array<i64: 8, 128>}, {pipeline_mode = #tpu.pipeline_mode<synchronous>, transform_indices = @transform_1, window_bounds = array<i64: 128, 128>}, {pipeline_mode = #tpu.pipeline_mode<synchronous>, transform_indices = @transform_2, window_bounds = array<i64: 1, 128>}, {pipeline_mode = #tpu.pipeline_mode<synchronous>, transform_indices = @transform_3, window_bounds = array<i64: 128, 384>}, {pipeline_mode = #tpu.pipeline_mode<synchronous>, transform_indices = @transform_4, window_bounds = array<i64: 1, 384>}, {transform_indices = @transform_5, window_bounds = array<i64: 8, 512>}]} {
    %c0 = arith.constant 0 : index
    %c0_0 = arith.constant 0 : index
    %0 = vector.load %arg1[%c0, %c0_0] : memref<8x128xf32, #tpu.memory_space<vmem>>, vector<8x128xf32>
    %c0_1 = arith.constant 0 : index
    %c0_2 = arith.constant 0 : index
    %1 = vector.load %arg2[%c0_1, %c0_2] : memref<128x128xf32, #tpu.memory_space<vmem>>, vector<128x128xf32>
    %cst = arith.constant dense<0.000000e+00> : vector<8x128xf32>
    %2 = tpu.matmul %0, %1, %cst {dimension_numbers = #tpu.dot_dimension_numbers<[1], [0], [0], [1], [0, 0, 1, 1], [], []>} : vector<8x128xf32>, vector<128x128xf32>, vector<8x128xf32> -> vector<8x128xf32>
    %c0_3 = arith.constant 0 : index
    %c0_4 = arith.constant 0 : index
    %3 = vector.load %arg3[%c0_3, %c0_4] : memref<1x128xf32, #tpu.memory_space<vmem>>, vector<1x128xf32>
    %4 = vector.broadcast %3 : vector<1x128xf32> to vector<8x128xf32>
    %5 = arith.addf %2, %4 : vector<8x128xf32>
    %cst_5 = arith.constant 0.000000e+00 : f32
    %6 = vector.broadcast %cst_5 : f32 to vector<8x128xf32>
    %7 = arith.maximumf %5, %6 : vector<8x128xf32>
    %c0_6 = arith.constant 0 : index
    %c0_7 = arith.constant 0 : index
    %8 = vector.load %arg4[%c0_6, %c0_7] : memref<128x384xf32, #tpu.memory_space<vmem>>, vector<128x384xf32>
    %cst_8 = arith.constant dense<0.000000e+00> : vector<8x384xf32>
    %9 = tpu.matmul %7, %8, %cst_8 {dimension_numbers = #tpu.dot_dimension_numbers<[1], [0], [0], [1], [0, 0, 1, 1], [], []>} : vector<8x128xf32>, vector<128x384xf32>, vector<8x384xf32> -> vector<8x384xf32>
    %c0_9 = arith.constant 0 : index
    %c0_10 = arith.constant 0 : index
    %10 = vector.load %arg5[%c0_9, %c0_10] : memref<1x384xf32, #tpu.memory_space<vmem>>, vector<1x384xf32>
    %11 = vector.broadcast %10 : vector<1x384xf32> to vector<8x384xf32>
    %12 = arith.addf %9, %11 : vector<8x384xf32>
    %cst_11 = arith.constant 0.000000e+00 : f32
    %13 = vector.broadcast %cst_11 : f32 to vector<8x384xf32>
    %14 = arith.maximumf %12, %13 : vector<8x384xf32>
    %15 = vector.broadcast %cst_11 : f32 to vector<8x384xf32>
    %16 = arith.subf %12, %15 : vector<8x384xf32>
    %17 = arith.cmpf one, %16, %16 : vector<8x384xf32>
    %18 = vector.broadcast %cst_11 : f32 to vector<8x384xf32>
    %19 = arith.addf %12, %18 : vector<8x384xf32>
    %20 = math.absf %16 : vector<8x384xf32>
    %cst_12 = arith.constant 0.000000e+00 : f32
    %21 = vector.broadcast %cst_12 : f32 to vector<8x384xf32>
    %22 = arith.subf %21, %20 : vector<8x384xf32>
    %23 = math.exp %22 : vector<8x384xf32>
    %24 = math.log1p %23 : vector<8x384xf32>
    %25 = arith.addf %14, %24 : vector<8x384xf32>
    %26 = arith.select %17, %19, %25 : vector<8x384xi1>, vector<8x384xf32>
    %cst_13 = arith.constant 1.000000e+00 : f32
    %27 = vector.broadcast %cst_13 : f32 to vector<8x384xf32>
    %28 = arith.addf %26, %27 : vector<8x384xf32>
    %29 = vector.extract_strided_slice %28 {offsets = [0, 0], sizes = [8, 128], strides = [1, 1]} : vector<8x384xf32> to vector<8x128xf32>
    %30 = vector.extract_strided_slice %28 {offsets = [0, 128], sizes = [8, 128], strides = [1, 1]} : vector<8x384xf32> to vector<8x128xf32>
    %cst_14 = arith.constant 1.000000e+00 : f32
    %31 = vector.broadcast %cst_14 : f32 to vector<8x128xf32>
    %32 = arith.subf %29, %31 : vector<8x128xf32>
    %cst_15 = arith.constant 1.000000e+00 : f32
    %33 = vector.broadcast %cst_15 : f32 to vector<8x128xf32>
    %34 = arith.subf %30, %33 : vector<8x128xf32>
    %35 = arith.mulf %32, %34 : vector<8x128xf32>
    %cst_16 = arith.constant 1.250000e-01 : f32
    %36 = vector.broadcast %cst_16 : f32 to vector<8x128xf32>
    %37 = arith.mulf %35, %36 : vector<8x128xf32>
    %38 = arith.addf %37, %29 : vector<8x128xf32>
    %39 = arith.addf %38, %30 : vector<8x128xf32>
    %cst_17 = arith.constant 1.000000e+00 : f32
    %40 = vector.broadcast %cst_17 : f32 to vector<8x128xf32>
    %41 = arith.subf %39, %40 : vector<8x128xf32>
    %42 = vector.extract_strided_slice %28 {offsets = [0, 256], sizes = [8, 128], strides = [1, 1]} : vector<8x384xf32> to vector<8x128xf32>
    %cst_18 = arith.constant 1.000000e+00 : f32
    %43 = vector.broadcast %cst_18 : f32 to vector<8x128xf32>
    %44 = arith.subf %41, %43 : vector<8x128xf32>
    %cst_19 = arith.constant 1.000000e+00 : f32
    %45 = vector.broadcast %cst_19 : f32 to vector<8x128xf32>
    %46 = arith.subf %42, %45 : vector<8x128xf32>
    %47 = arith.mulf %44, %46 : vector<8x128xf32>
    %cst_20 = arith.constant 1.250000e-01 : f32
    %48 = vector.broadcast %cst_20 : f32 to vector<8x128xf32>
    %49 = arith.mulf %47, %48 : vector<8x128xf32>
    %50 = arith.addf %49, %41 : vector<8x128xf32>
    %51 = arith.addf %50, %42 : vector<8x128xf32>
    %cst_21 = arith.constant 1.000000e+00 : f32
    %52 = vector.broadcast %cst_21 : f32 to vector<8x128xf32>
    %53 = arith.subf %51, %52 : vector<8x128xf32>
    %54 = tpu.concatenate %28, %53 in 1 : vector<8x384xf32>, vector<8x128xf32> -> vector<8x512xf32>
    %c0_22 = arith.constant 0 : index
    %c0_23 = arith.constant 0 : index
    %55 = vector.load %arg6[%c0_22, %c0_23] : memref<8x512xf32, #tpu.memory_space<vmem>>, vector<8x512xf32>
    tpu.vector_store %arg6[%c0_22, %c0_23], %54 {strides = array<i32>} : memref<8x512xf32, #tpu.memory_space<vmem>>, vector<8x512xf32>,
    return
  }
  func.func @transform_0(%arg0: i32) -> (i32, i32) {
    %c0_i32 = arith.constant 0 : i32
    %c0_i32_0 = arith.constant 0 : i32
    return %arg0, %c0_i32 : i32, i32
  }
  func.func @transform_1(%arg0: i32) -> (i32, i32) {
    %c0_i32 = arith.constant 0 : i32
    %c0_i32_0 = arith.constant 0 : i32
    %c0_i32_1 = arith.constant 0 : i32
    return %c0_i32, %c0_i32_0 : i32, i32
  }
  func.func @transform_2(%arg0: i32) -> (i32, i32) {
    %c0_i32 = arith.constant 0 : i32
    %c0_i32_0 = arith.constant 0 : i32
    %c0_i32_1 = arith.constant 0 : i32
    return %c0_i32, %c0_i32_0 : i32, i32
  }
  func.func @transform_3(%arg0: i32) -> (i32, i32) {
    %c0_i32 = arith.constant 0 : i32
    %c0_i32_0 = arith.constant 0 : i32
    %c0_i32_1 = arith.constant 0 : i32
    return %c0_i32, %c0_i32_0 : i32, i32
  }
  func.func @transform_4(%arg0: i32) -> (i32, i32) {
    %c0_i32 = arith.constant 0 : i32
    %c0_i32_0 = arith.constant 0 : i32
    %c0_i32_1 = arith.constant 0 : i32
    return %c0_i32, %c0_i32_0 : i32, i32
  }
  func.func @transform_5(%arg0: i32) -> (i32, i32) {
    %c0_i32 = arith.constant 0 : i32
    %c0_i32_0 = arith.constant 0 : i32
    return %arg0, %c0_i32 : i32, i32
  }
}

</mosaic_0001>

<llo_original>
// kernel: tpu_custom_call.1
$region0: #{tpu_custom_call.1}
  #allocation0 [shape = 'u32[]', space=smem, size = 0x4, offset = 0x4, fixed_abs, tag = 'smem constant byte address 0x4 - core index']
  #allocation1 [shape = 'u32[144,128]{1,0:T(1,128)}', space=vmem, size = 0x12000, scoped, tag = 'internal scratch']
  %s0 = inlined_call_operand.hbm [shape: f32[8,128], index: 0, kind: input, shape index: {}]
  %s1 = inlined_call_operand.hbm [shape: f32[128,128], index: 1, kind: input, shape index: {}]
  %s2 = inlined_call_operand.vmem [shape: f32[1,128], index: 2, kind: input, shape index: {}]
  %s3 = inlined_call_operand.hbm [shape: f32[128,384], index: 3, kind: input, shape index: {}]
  %s4 = inlined_call_operand.vmem [shape: f32[1,384], index: 4, kind: input, shape index: {}]
  %s5 = inlined_call_operand.hbm [shape: f32[8,512], index: 5, kind: output, shape index: {}]
  %s6 = sld [smem:[#allocation0]]
  $region42: #{tpu_custom_call.1} parent=0
    _
  %s8 = ssub.s32 1, %s6
  %s9 = scalar_select 0, %s8, %s6
  $region1: #{tpu_custom_call.1} parent=0
    #allocation2 [shape = 'u8[4096]{0}', space=vmem, size = 0x1000, scoped, tag = 'input window, operand 0, single buffered']
    #allocation3 [shape = 's32[1]{0}', space=sflag, size = 0x4, scoped, tag = 'scoped memory for tpu_custom_call.1']
    #allocation4 [shape = 's32[1]{0}', space=sflag, size = 0x4, scoped, tag = 'scoped memory for tpu_custom_call.1']
    #allocation5 [shape = 'u8[65536]{0}', space=vmem, size = 0x10000, scoped, tag = 'input window, operand 1, single buffered']
    #allocation6 [shape = 's32[1]{0}', space=sflag, size = 0x4, scoped, tag = 'scoped memory for tpu_custom_call.1']
    #allocation7 [shape = 'u8[196608]{0}', space=vmem, size = 0x30000, scoped, tag = 'input window, operand 3, single buffered']
    #allocation8 [shape = 'u8[16384]{0}', space=vmem, size = 0x4000, scoped, tag = 'output window, operand 0, single buffered']
    %10 = vsyncpa [#allocation3], 0
    %11 = vsyncpa [#allocation6], 0
    %12 = vsyncpa [#allocation4], 0
    // Predicated region
    $region2: #{tpu_custom_call.1} parent=1 // pred_check
      _
    $region3: #{tpu_custom_call.1} parent=1 // pred_check_branch
      %14 = sbr.rel (0) target = $region5
    $region4: #{tpu_custom_call.1} parent=1 // pred_region
      %s16 = ssub.s32 128, 128
      %17 = vsyncadd [#allocation3], %s16
      %s19 = sshll.u32 [#allocation2], 4
      %s20 = int_to_ptr.vmem [resolvable:$true] %s19
      %22 = dma.hbm_to_vmem [thread:$0]  %s0, 128, %s20, [#allocation3]
    $region5: #{tpu_custom_call.1} parent=1 // pred_fallthru
      _
    // Predicated region
    $region6: #{tpu_custom_call.1} parent=1 // pred_check
      _
    $region7: #{tpu_custom_call.1} parent=1 // pred_check_branch
      %24 = sbr.rel (0) target = $region9
    $region8: #{tpu_custom_call.1} parent=1 // pred_region
      %s26 = ssub.s32 2048, 2048
      %27 = vsyncadd [#allocation6], %s26
      %s28 = sshll.u32 [#allocation5], 4
      %s29 = int_to_ptr.vmem [resolvable:$true] %s28
      %34 = dma.hbm_to_vmem [thread:$0]  %s1, 2048, %s29, [#allocation6], 128, 128, 8
    $region9: #{tpu_custom_call.1} parent=1 // pred_fallthru
      _
    // Predicated region
    $region10: #{tpu_custom_call.1} parent=1 // pred_check
      _
    $region11: #{tpu_custom_call.1} parent=1 // pred_check_branch
      %36 = sbr.rel (0) target = $region13
    $region12: #{tpu_custom_call.1} parent=1 // pred_region
      _
    $region13: #{tpu_custom_call.1} parent=1 // pred_fallthru
      _
    // Predicated region
    $region14: #{tpu_custom_call.1} parent=1 // pred_check
      _
    $region15: #{tpu_custom_call.1} parent=1 // pred_check_branch
      %38 = sbr.rel (0) target = $region17
    $region16: #{tpu_custom_call.1} parent=1 // pred_region
      %s40 = ssub.s32 6144, 6144
      %41 = vsyncadd [#allocation6], %s40
      %s42 = sshll.u32 [#allocation7], 4
      %s43 = int_to_ptr.vmem [resolvable:$true] %s42
      %48 = dma.hbm_to_vmem [thread:$0]  %s3, 6144, %s43, [#allocation6], 384, 384, 24
    $region17: #{tpu_custom_call.1} parent=1 // pred_fallthru
      _
    // Predicated region
    $region18: #{tpu_custom_call.1} parent=1 // pred_check
      _
    $region19: #{tpu_custom_call.1} parent=1 // pred_check_branch
      %50 = sbr.rel (0) target = $region21
    $region20: #{tpu_custom_call.1} parent=1 // pred_region
      _
    $region21: #{tpu_custom_call.1} parent=1 // pred_fallthru
      _
    // Predicated region
    $region22: #{tpu_custom_call.1} parent=1 // pred_check
      _
    $region23: #{tpu_custom_call.1} parent=1 // pred_check_branch
      %52 = sbr.rel (0) target = $region25
    $region24: #{tpu_custom_call.1} parent=1 // pred_region
      %53 = dma.done [#allocation3], 128
    $region25: #{tpu_custom_call.1} parent=1 // pred_fallthru
      _
    // Predicated region
    $region26: #{tpu_custom_call.1} parent=1 // pred_check
      _
    $region27: #{tpu_custom_call.1} parent=1 // pred_check_branch
      %55 = sbr.rel (0) target = $region29
    $region28: #{tpu_custom_call.1} parent=1 // pred_region
      %56 = dma.done [#allocation6], 2048
    $region29: #{tpu_custom_call.1} parent=1 // pred_fallthru
      _
    // Predicated region
    $region30: #{tpu_custom_call.1} parent=1 // pred_check
      _
    $region31: #{tpu_custom_call.1} parent=1 // pred_check_branch
      %58 = sbr.rel (0) target = $region33
    $region32: #{tpu_custom_call.1} parent=1 // pred_region
      %59 = dma.done [#allocation6], 6144
    $region33: #{tpu_custom_call.1} parent=1 // pred_fallthru
      _
    %v60 = vld [vmem:[#allocation2] sm:$0xff]
    %v61 = vld [vmem:[#allocation5] sm:$0xff]
    %v62 = vld [vmem:[#allocation5 + $0x8] sm:$0xff]
    %v63 = vld [vmem:[#allocation5 + $0x10] sm:$0xff]
    %v64 = vld [vmem:[#allocation5 + $0x18] sm:$0xff]
    %v65 = vld [vmem:[#allocation5 + $0x20] sm:$0xff]
    %v66 = vld [vmem:[#allocation5 + $0x28] sm:$0xff]
    %v67 = vld [vmem:[#allocation5 + $0x30] sm:$0xff]
    %v68 = vld [vmem:[#allocation5 + $0x38] sm:$0xff]
    %v69 = vld [vmem:[#allocation5 + $0x40] sm:$0xff]
    %v70 = vld [vmem:[#allocation5 + $0x48] sm:$0xff]
    %v71 = vld [vmem:[#allocation5 + $0x50] sm:$0xff]
    %v72 = vld [vmem:[#allocation5 + $0x58] sm:$0xff]
    %v73 = vld [vmem:[#allocation5 + $0x60] sm:$0xff]
    %v74 = vld [vmem:[#allocation5 + $0x68] sm:$0xff]
    %v75 = vld [vmem:[#allocation5 + $0x70] sm:$0xff]
    %v76 = vld [vmem:[#allocation5 + $0x78] sm:$0xff]
    %v77 = vld [vmem:[%s2] sm:$0x1]
    %v79 = vlaneseq
    %v80 = vshrl.u32 %v79, 7
    %v81 = vsub.s32 0, %v80
    %v82 = vrot.slane %v77, %v81
    %84 = vmatprep.subr.mxu0 0.0
    %85 = vmatpush1.msra.mxu0 %v61
    %86 = vmatprep.subr.mxu0 0.0
    %87 = vmatpush1.msra.mxu0 %v62
    %88 = vmatprep.subr.mxu0 0.0
    %89 = vmatpush1.msra.mxu0 %v63
    %90 = vmatprep.subr.mxu0 0.0
    %91 = vmatpush1.msra.mxu0 %v64
    %92 = vmatprep.subr.mxu0 0.0
    %93 = vmatpush1.msra.mxu0 %v65
    %94 = vmatprep.subr.mxu0 0.0
    %95 = vmatpush1.msra.mxu0 %v66
    %96 = vmatprep.subr.mxu0 0.0
    %97 = vmatpush1.msra.mxu0 %v67
    %98 = vmatprep.subr.mxu0 0.0
    %99 = vmatpush1.msra.mxu0 %v68
    %100 = vmatprep.subr.mxu0 0.0
    %101 = vmatpush1.msra.mxu0 %v69
    %102 = vmatprep.subr.mxu0 0.0
    %103 = vmatpush1.msra.mxu0 %v70
    %104 = vmatprep.subr.mxu0 0.0
    %105 = vmatpush1.msra.mxu0 %v71
    %106 = vmatprep.subr.mxu0 0.0
    %107 = vmatpush1.msra.mxu0 %v72
    %108 = vmatprep.subr.mxu0 0.0
    %109 = vmatpush1.msra.mxu0 %v73
    %110 = vmatprep.subr.mxu0 0.0
    %111 = vmatpush1.msra.mxu0 %v74
    %112 = vmatprep.subr.mxu0 0.0
    %113 = vmatpush1.msra.mxu0 %v75
    %114 = vmatprep.subr.mxu0 0.0
    %115 = vmatpush1.msra.mxu0 %v76
    %116 = vmatprep.subr.mxu0 0.0
    %117 = vmatpush1.msra.mxu0 0.0
    %118 = vmatprep.subr.mxu0 0.0
    %119 = vmatpush1.msra.mxu0 0.0
    %120 = vmatprep.subr.mxu0 0.0
    %121 = vmatpush1.msra.mxu0 0.0
    %122 = vmatprep.subr.mxu0 0.0
    %123 = vmatpush1.msra.mxu0 0.0
    %124 = vmatprep.subr.mxu0 0.0
    %125 = vmatpush1.msra.mxu0 0.0
    %126 = vmatprep.subr.mxu0 0.0
    %127 = vmatpush1.msra.mxu0 0.0
    %128 = vmatprep.subr.mxu0 0.0
    %129 = vmatpush1.msra.mxu0 0.0
    %130 = vmatprep.subr.mxu0 0.0
    %131 = vmatpush1.msra.mxu0 0.0
    %132 = vmatprep.subr.mxu0 0.0
    %133 = vmatpush1.msra.mxu0 0.0
    %134 = vmatprep.subr.mxu0 0.0
    %135 = vmatpush1.msra.mxu0 0.0
    %136 = vmatprep.subr.mxu0 0.0
    %137 = vmatpush1.msra.mxu0 0.0
    %138 = vmatprep.subr.mxu0 0.0
    %139 = vmatpush1.msra.mxu0 0.0
    %140 = vmatprep.subr.mxu0 0.0
    %141 = vmatpush1.msra.mxu0 0.0
    %142 = vmatprep.subr.mxu0 0.0
    %143 = vmatpush1.msra.mxu0 0.0
    %144 = vmatprep.subr.mxu0 0.0
    %145 = vmatpush1.msra.mxu0 0.0
    %146 = vmatprep.subr.mxu0 0.0
    %147 = vmatpush1.msra.mxu0 0.0
    %148 = vmatprep.mubr.f32.mxu0 0.0
    %149 = vmatmul.mubr.f32.gmra.mrb[0].mxu0 %v60
    %v150 = vpop.f32.mrb[0].mxu0
    %v151 = vadd.f32 %v82, %v150
    %v152 = vpop.f32.mrb[0].mxu0
    %153 = vdwg.mxu0
    %v154 = vmax.f32 %v151, 0.0
    %v155 = vld [vmem:[#allocation7] sm:$0xff]
    %v156 = vld [vmem:[#allocation7 + $0x8] sm:$0xff]
    %v157 = vld [vmem:[#allocation7 + $0x10] sm:$0xff]
    %v158 = vld [vmem:[#allocation7 + $0x18] sm:$0xff]
    %v159 = vld [vmem:[#allocation7 + $0x20] sm:$0xff]
    %v160 = vld [vmem:[#allocation7 + $0x28] sm:$0xff]
    %v161 = vld [vmem:[#allocation7 + $0x30] sm:$0xff]
    %v162 = vld [vmem:[#allocation7 + $0x38] sm:$0xff]
    %v163 = vld [vmem:[#allocation7 + $0x40] sm:$0xff]
    %v164 = vld [vmem:[#allocation7 + $0x48] sm:$0xff]
    %v165 = vld [vmem:[#allocation7 + $0x50] sm:$0xff]
    %v166 = vld [vmem:[#allocation7 + $0x58] sm:$0xff]
    %v167 = vld [vmem:[#allocation7 + $0x60] sm:$0xff]
    %v168 = vld [vmem:[#allocation7 + $0x68] sm:$0xff]
    %v169 = vld [vmem:[#allocation7 + $0x70] sm:$0xff]
    %v170 = vld [vmem:[#allocation7 + $0x78] sm:$0xff]
    %v171 = vld [vmem:[#allocation7 + $0x80] sm:$0xff]
    %v172 = vld [vmem:[#allocation7 + $0x88] sm:$0xff]
    %v173 = vld [vmem:[#allocation7 + $0x90] sm:$0xff]
    %v174 = vld [vmem:[#allocation7 + $0x98] sm:$0xff]
    %v175 = vld [vmem:[#allocation7 + $0xa0] sm:$0xff]
    %v176 = vld [vmem:[#allocation7 + $0xa8] sm:$0xff]
    %v177 = vld [vmem:[#allocation7 + $0xb0] sm:$0xff]
    %v178 = vld [vmem:[#allocation7 + $0xb8] sm:$0xff]
    %v179 = vld [vmem:[#allocation7 + $0xc0] sm:$0xff]
    %v180 = vld [vmem:[#allocation7 + $0xc8] sm:$0xff]
    %v181 = vld [vmem:[#allocation7 + $0xd0] sm:$0xff]
    %v182 = vld [vmem:[#allocation7 + $0xd8] sm:$0xff]
    %v183 = vld [vmem:[#allocation7 + $0xe0] sm:$0xff]
    %v184 = vld [vmem:[#allocation7 + $0xe8] sm:$0xff]
    %v185 = vld [vmem:[#allocation7 + $0xf0] sm:$0xff]
    %v186 = vld [vmem:[#allocation7 + $0xf8] sm:$0xff]
    %v187 = vld [vmem:[#allocation7 + $0x100] sm:$0xff]
    %v188 = vld [vmem:[#allocation7 + $0x108] sm:$0xff]
    %v189 = vld [vmem:[#allocation7 + $0x110] sm:$0xff]
    %v190 = vld [vmem:[#allocation7 + $0x118] sm:$0xff]
    %v191 = vld [vmem:[#allocation7 + $0x120] sm:$0xff]
    %v192 = vld [vmem:[#allocation7 + $0x128] sm:$0xff]
    %v193 = vld [vmem:[#allocation7 + $0x130] sm:$0xff]
    %v194 = vld [vmem:[#allocation7 + $0x138] sm:$0xff]
    %v195 = vld [vmem:[#allocation7 + $0x140] sm:$0xff]
    %v196 = vld [vmem:[#allocation7 + $0x148] sm:$0xff]
    %v197 = vld [vmem:[#allocation7 + $0x150] sm:$0xff]
    %v198 = vld [vmem:[#allocation7 + $0x158] sm:$0xff]
    %v199 = vld [vmem:[#allocation7 + $0x160] sm:$0xff]
    %v200 = vld [vmem:[#allocation7 + $0x168] sm:$0xff]
    %v201 = vld [vmem:[#allocation7 + $0x170] sm:$0xff]
    %v202 = vld [vmem:[#allocation7 + $0x178] sm:$0xff]
    %v203 = vld [vmem:[%s4] sm:$0x7]
    %v205 = vlaneseq
    %v206 = vshrl.u32 %v205, 7
    %v207 = vsub.s32 0, %v206
    %v208 = vrot.slane %v203, %v207
    %v209 = vlaneseq
    %v210 = vshrl.u32 %v209, 7
    %v211 = vsub.s32 1, %v210
    %v212 = vrot.slane %v203, %v211
    %v213 = vlaneseq
    %v214 = vshrl.u32 %v213, 7
    %v215 = vsub.s32 2, %v214
    %v216 = vrot.slane %v203, %v215
    %220 = vmatprep.subr.mxu0 %v156
    %221 = vmatpush1.msra.mxu0 %v155
    %222 = vmatprep.subr.mxu0 %v159
    %223 = vmatpush1.msra.mxu0 %v158
    %224 = vmatprep.subr.mxu0 %v162
    %225 = vmatpush1.msra.mxu0 %v161
    %226 = vmatprep.subr.mxu0 %v165
    %227 = vmatpush1.msra.mxu0 %v164
    %228 = vmatprep.subr.mxu0 %v168
    %229 = vmatpush1.msra.mxu0 %v167
    %230 = vmatprep.subr.mxu0 %v171
    %231 = vmatpush1.msra.mxu0 %v170
    %232 = vmatprep.subr.mxu0 %v174
    %233 = vmatpush1.msra.mxu0 %v173
    %234 = vmatprep.subr.mxu0 %v177
    %235 = vmatpush1.msra.mxu0 %v176
    %236 = vmatprep.subr.mxu0 %v180
    %237 = vmatpush1.msra.mxu0 %v179
    %238 = vmatprep.subr.mxu0 %v183
    %239 = vmatpush1.msra.mxu0 %v182
    %240 = vmatprep.subr.mxu0 %v186
    %241 = vmatpush1.msra.mxu0 %v185
    %242 = vmatprep.subr.mxu0 %v189
    %243 = vmatpush1.msra.mxu0 %v188
    %244 = vmatprep.subr.mxu0 %v192
    %245 = vmatpush1.msra.mxu0 %v191
    %246 = vmatprep.subr.mxu0 %v195
    %247 = vmatpush1.msra.mxu0 %v194
    %248 = vmatprep.subr.mxu0 %v198
    %249 = vmatpush1.msra.mxu0 %v197
    %250 = vmatprep.subr.mxu0 %v201
    %251 = vmatpush1.msra.mxu0 %v200
    %252 = vmatprep.subr.mxu0 0.0
    %253 = vmatpush1.msra.mxu0 0.0
    %254 = vmatprep.subr.mxu0 0.0
    %255 = vmatpush1.msra.mxu0 0.0
    %256 = vmatprep.subr.mxu0 0.0
    %257 = vmatpush1.msra.mxu0 0.0
    %258 = vmatprep.subr.mxu0 0.0
    %259 = vmatpush1.msra.mxu0 0.0
    %260 = vmatprep.subr.mxu0 0.0
    %261 = vmatpush1.msra.mxu0 0.0
    %262 = vmatprep.subr.mxu0 0.0
    %263 = vmatpush1.msra.mxu0 0.0
    %264 = vmatprep.subr.mxu0 0.0
    %265 = vmatpush1.msra.mxu0 0.0
    %266 = vmatprep.subr.mxu0 0.0
    %267 = vmatpush1.msra.mxu0 0.0
    %268 = vmatprep.subr.mxu0 0.0
    %269 = vmatpush1.msra.mxu0 0.0
    %270 = vmatprep.subr.mxu0 0.0
    %271 = vmatpush1.msra.mxu0 0.0
    %272 = vmatprep.subr.mxu0 0.0
    %273 = vmatpush1.msra.mxu0 0.0
    %274 = vmatprep.subr.mxu0 0.0
    %275 = vmatpush1.msra.mxu0 0.0
    %276 = vmatprep.subr.mxu0 0.0
    %277 = vmatpush1.msra.mxu0 0.0
    %278 = vmatprep.subr.mxu0 0.0
    %279 = vmatpush1.msra.mxu0 0.0
    %280 = vmatprep.subr.mxu0 0.0
    %281 = vmatpush1.msra.mxu0 0.0
    %282 = vmatprep.subr.mxu0 0.0
    %283 = vmatpush1.msra.mxu0 0.0
    %284 = vmatprep.mubr.f32.mxu0 0.0
    %285 = vmatmul.mubr.f32.gmra.mrb[0].mxu0 %v154
    %v286 = vpop.f32.mrb[0].mxu0
    %v287 = vadd.f32 %v208, %v286
    %v288 = vpop.f32.mrb[0].mxu0
    %v289 = vadd.f32 %v212, %v288
    %290 = vdwg.mxu0
    %291 = vmatprep.subr.mxu0 0.0
    %292 = vmatpush1.msra.mxu0 %v157
    %293 = vmatprep.subr.mxu0 0.0
    %294 = vmatpush1.msra.mxu0 %v160
    %295 = vmatprep.subr.mxu0 0.0
    %296 = vmatpush1.msra.mxu0 %v163
    %297 = vmatprep.subr.mxu0 0.0
    %298 = vmatpush1.msra.mxu0 %v166
    %299 = vmatprep.subr.mxu0 0.0
    %300 = vmatpush1.msra.mxu0 %v169
    %301 = vmatprep.subr.mxu0 0.0
    %302 = vmatpush1.msra.mxu0 %v172
    %303 = vmatprep.subr.mxu0 0.0
    %304 = vmatpush1.msra.mxu0 %v175
    %305 = vmatprep.subr.mxu0 0.0
    %306 = vmatpush1.msra.mxu0 %v178
    %307 = vmatprep.subr.mxu0 0.0
    %308 = vmatpush1.msra.mxu0 %v181
    %309 = vmatprep.subr.mxu0 0.0
    %310 = vmatpush1.msra.mxu0 %v184
    %311 = vmatprep.subr.mxu0 0.0
    %312 = vmatpush1.msra.mxu0 %v187
    %313 = vmatprep.subr.mxu0 0.0
    %314 = vmatpush1.msra.mxu0 %v190
    %315 = vmatprep.subr.mxu0 0.0
    %316 = vmatpush1.msra.mxu0 %v193
    %317 = vmatprep.subr.mxu0 0.0
    %318 = vmatpush1.msra.mxu0 %v196
    %319 = vmatprep.subr.mxu0 0.0
    %320 = vmatpush1.msra.mxu0 %v199
    %321 = vmatprep.subr.mxu0 0.0
    %322 = vmatpush1.msra.mxu0 %v202
    %323 = vmatprep.subr.mxu0 0.0
    %324 = vmatpush1.msra.mxu0 0.0
    %325 = vmatprep.subr.mxu0 0.0
    %326 = vmatpush1.msra.mxu0 0.0
    %327 = vmatprep.subr.mxu0 0.0
    %328 = vmatpush1.msra.mxu0 0.0
    %329 = vmatprep.subr.mxu0 0.0
    %330 = vmatpush1.msra.mxu0 0.0
    %331 = vmatprep.subr.mxu0 0.0
    %332 = vmatpush1.msra.mxu0 0.0
    %333 = vmatprep.subr.mxu0 0.0
    %334 = vmatpush1.msra.mxu0 0.0
    %335 = vmatprep.subr.mxu0 0.0
    %336 = vmatpush1.msra.mxu0 0.0
    %337 = vmatprep.subr.mxu0 0.0
    %338 = vmatpush1.msra.mxu0 0.0
    %339 = vmatprep.subr.mxu0 0.0
    %340 = vmatpush1.msra.mxu0 0.0
    %341 = vmatprep.subr.mxu0 0.0
    %342 = vmatpush1.msra.mxu0 0.0
    %343 = vmatprep.subr.mxu0 0.0
    %344 = vmatpush1.msra.mxu0 0.0
    %345 = vmatprep.subr.mxu0 0.0
    %346 = vmatpush1.msra.mxu0 0.0
    %347 = vmatprep.subr.mxu0 0.0
    %348 = vmatpush1.msra.mxu0 0.0
    %349 = vmatprep.subr.mxu0 0.0
    %350 = vmatpush1.msra.mxu0 0.0
    %351 = vmatprep.subr.mxu0 0.0
    %352 = vmatpush1.msra.mxu0 0.0
    %353 = vmatprep.subr.mxu0 0.0
    %354 = vmatpush1.msra.mxu0 0.0
    %355 = vmatprep.mubr.f32.mxu0 0.0
    %356 = vmatmul.mubr.f32.gmra.mrb[0].mxu0 %v154
    %v357 = vpop.f32.mrb[0].mxu0
    %v358 = vadd.f32 %v216, %v357
    %v359 = vpop.f32.mrb[0].mxu0
    %360 = vdwg.mxu0
    %v361 = vmax.f32 %v287, 0.0
    %v362 = vmax.f32 %v289, 0.0
    %v363 = vmax.f32 %v358, 0.0
    %vm364 = vcmp.ne.f32.partialorder %v287, %v287
    %vm365 = vcmp.ne.f32.partialorder %v289, %v289
    %vm366 = vcmp.ne.f32.partialorder %v358, %v358
    %v367 = vadd.f32 %v287, 0.0
    %v368 = vadd.f32 %v289, 0.0
    %v369 = vadd.f32 %v358, 0.0
    %v370 = vand.u32 2147483647, %v287
    %v371 = vand.u32 2147483647, %v289
    %v372 = vand.u32 2147483647, %v358
    %v373 = vsub.f32 0.0, %v370
    %v374 = vsub.f32 0.0, %v371
    %v375 = vsub.f32 0.0, %v372
    %v376 = vmul.f32 %v373, 1.442695
    %v377 = vpow.pop %v376
    %v378 = vmul.f32 %v374, 1.442695
    %v379 = vpow.pop %v378
    %v380 = vmul.f32 %v375, 1.442695
    %v381 = vpow.pop %v380
    %v382 = vadd.f32 %v377, 1.0
    %v383 = vlog2.pop %v382
    %v384 = vmul.f32 %v383, 0.6931472
    %v385 = vmul.f32 -0.5, %v377
    %v386 = vadd.f32 %v385, 1.0
    %v387 = vmul.f32 %v386, %v377
    %v388 = vand.u32 2147483647, %v377
    %vm389 = vcmp.lt.f32.partialorder %v388, 0.0004427343
    %v390 = vsel %vm389, %v387, %v384
    %v391 = vadd.f32 %v379, 1.0
    %v392 = vlog2.pop %v391
    %v393 = vmul.f32 %v392, 0.6931472
    %v394 = vmul.f32 -0.5, %v379
    %v395 = vadd.f32 %v394, 1.0
    %v396 = vmul.f32 %v395, %v379
    %v397 = vand.u32 2147483647, %v379
    %vm398 = vcmp.lt.f32.partialorder %v397, 0.0004427343
    %v399 = vsel %vm398, %v396, %v393
    %v400 = vadd.f32 %v381, 1.0
    %v401 = vlog2.pop %v400
    %v402 = vmul.f32 %v401, 0.6931472
    %v403 = vmul.f32 -0.5, %v381
    %v404 = vadd.f32 %v403, 1.0
    %v405 = vmul.f32 %v404, %v381
    %v406 = vand.u32 2147483647, %v381
    %vm407 = vcmp.lt.f32.partialorder %v406, 0.0004427343
    %v408 = vsel %vm407, %v405, %v402
    %v409 = vadd.f32 %v361, %v390
    %v410 = vadd.f32 %v362, %v399
    %v411 = vadd.f32 %v363, %v408
    %v412 = vsel %vm364, %v367, %v409
    %v413 = vsel %vm365, %v368, %v410
    %v414 = vsel %vm366, %v369, %v411
    %v415 = vadd.f32 %v412, 1.0
    %v416 = vadd.f32 %v413, 1.0
    %v417 = vadd.f32 %v414, 1.0
    %v418 = vsub.f32 %v415, 1.0
    %v419 = vsub.f32 %v416, 1.0
    %v420 = vmul.f32 %v418, %v419
    %v421 = vmul.f32 %v420, 0.125
    %v422 = vadd.f32 %v421, %v415
    %v423 = vadd.f32 %v422, %v416
    %v424 = vsub.f32 %v423, 1.0
    %v425 = vsub.f32 %v424, 1.0
    %v426 = vsub.f32 %v417, 1.0
    %v427 = vmul.f32 %v425, %v426
    %v428 = vmul.f32 %v427, 0.125
    %v429 = vadd.f32 %v428, %v424
    %v430 = vadd.f32 %v429, %v417
    %v431 = vsub.f32 %v430, 1.0
    %432 = vst [vmem:[#allocation8] sm:$0xff] %v415
    %433 = vst [vmem:[#allocation8 + $0x8] sm:$0xff] %v416
    %434 = vst [vmem:[#allocation8 + $0x10] sm:$0xff] %v417
    %435 = vst [vmem:[#allocation8 + $0x18] sm:$0xff] %v431
    // Predicated region
    $region34: #{tpu_custom_call.1} parent=1 // pred_check
      _
    $region35: #{tpu_custom_call.1} parent=1 // pred_check_branch
      %437 = sbr.rel (0) target = $region37
    $region36: #{tpu_custom_call.1} parent=1 // pred_region
      %s439 = ssub.s32 512, 512
      %440 = vsyncadd [#allocation4], %s439
      %s442 = sshll.u32 [#allocation8], 4
      %s443 = int_to_ptr.vmem [resolvable:$true] %s442
      %445 = dma.vmem_to_hbm [thread:$0]  %s443, 512, %s5, [#allocation4]
    $region37: #{tpu_custom_call.1} parent=1 // pred_fallthru
      _
    // Predicated region
    $region38: #{tpu_custom_call.1} parent=1 // pred_check
      _
    $region39: #{tpu_custom_call.1} parent=1 // pred_check_branch
      %447 = sbr.rel (0) target = $region41
    $region40: #{tpu_custom_call.1} parent=1 // pred_region
      %448 = dma.done [#allocation4], 512
    $region41: #{tpu_custom_call.1} parent=1 // pred_fallthru
      _
    %449 = vsyncpa [#allocation3], 1
    %450 = vsyncpa [#allocation6], 1
    %451 = vsyncpa [#allocation4], 1

// kernel: tpu_custom_call.1
$region0: #{tpu_custom_call.1}
  #allocation0 [shape = 'u32[]', space=smem, size = 0x4, offset = 0x4, fixed_abs, tag = 'smem constant byte address 0x4 - core index']
  #allocation1 [shape = 'u32[144,128]{1,0:T(1,128)}', space=vmem, size = 0x12000, scoped, tag = 'internal scratch']
  %s0 = inlined_call_operand.hbm [shape: f32[8,128], index: 0, kind: input, shape index: {}]
  %s1 = inlined_call_operand.hbm [shape: f32[128,128], index: 1, kind: input, shape index: {}]
  %s2 = inlined_call_operand.vmem [shape: f32[1,128], index: 2, kind: input, shape index: {}]
  %s3 = inlined_call_operand.hbm [shape: f32[128,384], index: 3, kind: input, shape index: {}]
  %s4 = inlined_call_operand.vmem [shape: f32[1,384], index: 4, kind: input, shape index: {}]
  %s5 = inlined_call_operand.hbm [shape: f32[8,512], index: 5, kind: output, shape index: {}]
  %s6 = sld [smem:[#allocation0]]
  $region42: #{tpu_custom_call.1} parent=0
    _
  %s8 = ssub.s32 1, %s6
  %s9 = scalar_select 0, %s8, %s6
  $region1: #{tpu_custom_call.1} parent=0
    #allocation2 [shape = 'u8[4096]{0}', space=vmem, size = 0x1000, scoped, tag = 'input window, operand 0, single buffered']
    #allocation3 [shape = 's32[1]{0}', space=sflag, size = 0x4, scoped, tag = 'scoped memory for tpu_custom_call.1']
    #allocation4 [shape = 's32[1]{0}', space=sflag, size = 0x4, scoped, tag = 'scoped memory for tpu_custom_call.1']
    #allocation5 [shape = 'u8[65536]{0}', space=vmem, size = 0x10000, scoped, tag = 'input window, operand 1, single buffered']
    #allocation6 [shape = 's32[1]{0}', space=sflag, size = 0x4, scoped, tag = 'scoped memory for tpu_custom_call.1']
    #allocation7 [shape = 'u8[196608]{0}', space=vmem, size = 0x30000, scoped, tag = 'input window, operand 3, single buffered']
    #allocation8 [shape = 'u8[16384]{0}', space=vmem, size = 0x4000, scoped, tag = 'output window, operand 0, single buffered']
    %10 = vsyncpa [#allocation3], 0
    %11 = vsyncpa [#allocation6], 0
    %12 = vsyncpa [#allocation4], 0
    // Predicated region
    $region2: #{tpu_custom_call.1} parent=1 // pred_check
      _
    $region3: #{tpu_custom_call.1} parent=1 // pred_check_branch
      %14 = sbr.rel (0) target = $region5
    $region4: #{tpu_custom_call.1} parent=1 // pred_region
      %s16 = ssub.s32 128, 128
      %17 = vsyncadd [#allocation3], %s16
      %s19 = sshll.u32 [#allocation2], 4
      %s20 = int_to_ptr.vmem [resolvable:$true] %s19
      %22 = dma.hbm_to_vmem [thread:$0]  %s0, 128, %s20, [#allocation3]
    $region5: #{tpu_custom_call.1} parent=1 // pred_fallthru
      _
    // Predicated region
    $region6: #{tpu_custom_call.1} parent=1 // pred_check
      _
    $region7: #{tpu_custom_call.1} parent=1 // pred_check_branch
      %24 = sbr.rel (0) target = $region9
    $region8: #{tpu_custom_call.1} parent=1 // pred_region
      %s26 = ssub.s32 2048, 2048
      %27 = vsyncadd [#allocation6], %s26
      %s28 = sshll.u32 [#allocation5], 4
      %s29 = int_to_ptr.vmem [resolvable:$true] %s28
      %34 = dma.hbm_to_vmem [thread:$0]  %s1, 2048, %s29, [#allocation6], 128, 128, 8
    $region9: #{tpu_custom_call.1} parent=1 // pred_fallthru
      _
    // Predicated region
    $region10: #{tpu_custom_call.1} parent=1 // pred_check
      _
    $region11: #{tpu_custom_call.1} parent=1 // pred_check_branch
      %36 = sbr.rel (0) target = $region13
    $region12: #{tpu_custom_call.1} parent=1 // pred_region
      _
    $region13: #{tpu_custom_call.1} parent=1 // pred_fallthru
      _
    // Predicated region
    $region14: #{tpu_custom_call.1} parent=1 // pred_check
      _
    $region15: #{tpu_custom_call.1} parent=1 // pred_check_branch
      %38 = sbr.rel (0) target = $region17
    $region16: #{tpu_custom_call.1} parent=1 // pred_region
      %s40 = ssub.s32 6144, 6144
      %41 = vsyncadd [#allocation6], %s40
      %s42 = sshll.u32 [#allocation7], 4
      %s43 = int_to_ptr.vmem [resolvable:$true] %s42
      %48 = dma.hbm_to_vmem [thread:$0]  %s3, 6144, %s43, [#allocation6], 384, 384, 24
    $region17: #{tpu_custom_call.1} parent=1 // pred_fallthru
      _
    // Predicated region
    $region18: #{tpu_custom_call.1} parent=1 // pred_check
      _
    $region19: #{tpu_custom_call.1} parent=1 // pred_check_branch
      %50 = sbr.rel (0) target = $region21
    $region20: #{tpu_custom_call.1} parent=1 // pred_region
      _
    $region21: #{tpu_custom_call.1} parent=1 // pred_fallthru
      _
    // Predicated region
    $region22: #{tpu_custom_call.1} parent=1 // pred_check
      _
    $region23: #{tpu_custom_call.1} parent=1 // pred_check_branch
      %52 = sbr.rel (0) target = $region25
    $region24: #{tpu_custom_call.1} parent=1 // pred_region
      %53 = dma.done [#allocation3], 128
    $region25: #{tpu_custom_call.1} parent=1 // pred_fallthru
      _
    // Predicated region
    $region26: #{tpu_custom_call.1} parent=1 // pred_check
      _
    $region27: #{tpu_custom_call.1} parent=1 // pred_check_branch
      %55 = sbr.rel (0) target = $region29
    $region28: #{tpu_custom_call.1} parent=1 // pred_region
      %56 = dma.done [#allocation6], 2048
    $region29: #{tpu_custom_call.1} parent=1 // pred_fallthru
      _
    // Predicated region
    $region30: #{tpu_custom_call.1} parent=1 // pred_check
      _
    $region31: #{tpu_custom_call.1} parent=1 // pred_check_branch
      %58 = sbr.rel (0) target = $region33
    $region32: #{tpu_custom_call.1} parent=1 // pred_region
      %59 = dma.done [#allocation6], 6144
    $region33: #{tpu_custom_call.1} parent=1 // pred_fallthru
      _
    %v60 = vld [vmem:[#allocation2] sm:$0xff]
    %v61 = vld [vmem:[#allocation5] sm:$0xff]
    %v62 = vld [vmem:[#allocation5 + $0x8] sm:$0xff]
    %v63 = vld [vmem:[#allocation5 + $0x10] sm:$0xff]
    %v64 = vld [vmem:[#allocation5 + $0x18] sm:$0xff]
    %v65 = vld [vmem:[#allocation5 + $0x20] sm:$0xff]
    %v66 = vld [vmem:[#allocation5 + $0x28] sm:$0xff]
    %v67 = vld [vmem:[#allocation5 + $0x30] sm:$0xff]
    %v68 = vld [vmem:[#allocation5 + $0x38] sm:$0xff]
    %v69 = vld [vmem:[#allocation5 + $0x40] sm:$0xff]
    %v70 = vld [vmem:[#allocation5 + $0x48] sm:$0xff]
    %v71 = vld [vmem:[#allocation5 + $0x50] sm:$0xff]
    %v72 = vld [vmem:[#allocation5 + $0x58] sm:$0xff]
    %v73 = vld [vmem:[#allocation5 + $0x60] sm:$0xff]
    %v74 = vld [vmem:[#allocation5 + $0x68] sm:$0xff]
    %v75 = vld [vmem:[#allocation5 + $0x70] sm:$0xff]
    %v76 = vld [vmem:[#allocation5 + $0x78] sm:$0xff]
    %v77 = vld [vmem:[%s2] sm:$0x1]
    %v79 = vlaneseq
    %v80 = vshrl.u32 %v79, 7
    %v81 = vsub.s32 0, %v80
    %v82 = vrot.slane %v77, %v81
    %84 = vmatprep.subr.mxu0 0.0
    %85 = vmatpush1.msra.mxu0 %v61
    %86 = vmatprep.subr.mxu0 0.0
    %87 = vmatpush1.msra.mxu0 %v62
    %88 = vmatprep.subr.mxu0 0.0
    %89 = vmatpush1.msra.mxu0 %v63
    %90 = vmatprep.subr.mxu0 0.0
    %91 = vmatpush1.msra.mxu0 %v64
    %92 = vmatprep.subr.mxu0 0.0
    %93 = vmatpush1.msra.mxu0 %v65
    %94 = vmatprep.subr.mxu0 0.0
    %95 = vmatpush1.msra.mxu0 %v66
    %96 = vmatprep.subr.mxu0 0.0
    %97 = vmatpush1.msra.mxu0 %v67
    %98 = vmatprep.subr.mxu0 0.0
    %99 = vmatpush1.msra.mxu0 %v68
    %100 = vmatprep.subr.mxu0 0.0
    %101 = vmatpush1.msra.mxu0 %v69
    %102 = vmatprep.subr.mxu0 0.0
    %103 = vmatpush1.msra.mxu0 %v70
    %104 = vmatprep.subr.mxu0 0.0
    %105 = vmatpush1.msra.mxu0 %v71
    %106 = vmatprep.subr.mxu0 0.0
    %107 = vmatpush1.msra.mxu0 %v72
    %108 = vmatprep.subr.mxu0 0.0
    %109 = vmatpush1.msra.mxu0 %v73
    %110 = vmatprep.subr.mxu0 0.0
    %111 = vmatpush1.msra.mxu0 %v74
    %112 = vmatprep.subr.mxu0 0.0
    %113 = vmatpush1.msra.mxu0 %v75
    %114 = vmatprep.subr.mxu0 0.0
    %115 = vmatpush1.msra.mxu0 %v76
    %116 = vmatprep.subr.mxu0 0.0
    %117 = vmatpush1.msra.mxu0 0.0
    %118 = vmatprep.subr.mxu0 0.0
    %119 = vmatpush1.msra.mxu0 0.0
    %120 = vmatprep.subr.mxu0 0.0
    %121 = vmatpush1.msra.mxu0 0.0
    %122 = vmatprep.subr.mxu0 0.0
    %123 = vmatpush1.msra.mxu0 0.0
    %124 = vmatprep.subr.mxu0 0.0
    %125 = vmatpush1.msra.mxu0 0.0
    %126 = vmatprep.subr.mxu0 0.0
    %127 = vmatpush1.msra.mxu0 0.0
    %128 = vmatprep.subr.mxu0 0.0
    %129 = vmatpush1.msra.mxu0 0.0
    %130 = vmatprep.subr.mxu0 0.0
    %131 = vmatpush1.msra.mxu0 0.0
    %132 = vmatprep.subr.mxu0 0.0
    %133 = vmatpush1.msra.mxu0 0.0
    %134 = vmatprep.subr.mxu0 0.0
    %135 = vmatpush1.msra.mxu0 0.0
    %136 = vmatprep.subr.mxu0 0.0
    %137 = vmatpush1.msra.mxu0 0.0
    %138 = vmatprep.subr.mxu0 0.0
    %139 = vmatpush1.msra.mxu0 0.0
    %140 = vmatprep.subr.mxu0 0.0
    %141 = vmatpush1.msra.mxu0 0.0
    %142 = vmatprep.subr.mxu0 0.0
    %143 = vmatpush1.msra.mxu0 0.0
    %144 = vmatprep.subr.mxu0 0.0
    %145 = vmatpush1.msra.mxu0 0.0
    %146 = vmatprep.subr.mxu0 0.0
    %147 = vmatpush1.msra.mxu0 0.0
    %148 = vmatprep.mubr.f32.mxu0 0.0
    %149 = vmatmul.mubr.f32.gmra.mrb[0].mxu0 %v60
    %v150 = vpop.f32.mrb[0].mxu0
    %v151 = vadd.f32 %v82, %v150
    %v152 = vpop.f32.mrb[0].mxu0
    %153 = vdwg.mxu0
    %v154 = vmax.f32 %v151, 0.0
    %v155 = vld [vmem:[#allocation7] sm:$0xff]
    %v156 = vld [vmem:[#allocation7 + $0x8] sm:$0xff]
    %v157 = vld [vmem:[#allocation7 + $0x10] sm:$0xff]
    %v158 = vld [vmem:[#allocation7 + $0x18] sm:$0xff]
    %v159 = vld [vmem:[#allocation7 + $0x20] sm:$0xff]
    %v160 = vld [vmem:[#allocation7 + $0x28] sm:$0xff]
    %v161 = vld [vmem:[#allocation7 + $0x30] sm:$0xff]
    %v162 = vld [vmem:[#allocation7 + $0x38] sm:$0xff]
    %v163 = vld [vmem:[#allocation7 + $0x40] sm:$0xff]
    %v164 = vld [vmem:[#allocation7 + $0x48] sm:$0xff]
    %v165 = vld [vmem:[#allocation7 + $0x50] sm:$0xff]
    %v166 = vld [vmem:[#allocation7 + $0x58] sm:$0xff]
    %v167 = vld [vmem:[#allocation7 + $0x60] sm:$0xff]
    %v168 = vld [vmem:[#allocation7 + $0x68] sm:$0xff]
    %v169 = vld [vmem:[#allocation7 + $0x70] sm:$0xff]
    %v170 = vld [vmem:[#allocation7 + $0x78] sm:$0xff]
    %v171 = vld [vmem:[#allocation7 + $0x80] sm:$0xff]
    %v172 = vld [vmem:[#allocation7 + $0x88] sm:$0xff]
    %v173 = vld [vmem:[#allocation7 + $0x90] sm:$0xff]
    %v174 = vld [vmem:[#allocation7 + $0x98] sm:$0xff]
    %v175 = vld [vmem:[#allocation7 + $0xa0] sm:$0xff]
    %v176 = vld [vmem:[#allocation7 + $0xa8] sm:$0xff]
    %v177 = vld [vmem:[#allocation7 + $0xb0] sm:$0xff]
    %v178 = vld [vmem:[#allocation7 + $0xb8] sm:$0xff]
    %v179 = vld [vmem:[#allocation7 + $0xc0] sm:$0xff]
    %v180 = vld [vmem:[#allocation7 + $0xc8] sm:$0xff]
    %v181 = vld [vmem:[#allocation7 + $0xd0] sm:$0xff]
    %v182 = vld [vmem:[#allocation7 + $0xd8] sm:$0xff]
    %v183 = vld [vmem:[#allocation7 + $0xe0] sm:$0xff]
    %v184 = vld [vmem:[#allocation7 + $0xe8] sm:$0xff]
    %v185 = vld [vmem:[#allocation7 + $0xf0] sm:$0xff]
    %v186 = vld [vmem:[#allocation7 + $0xf8] sm:$0xff]
    %v187 = vld [vmem:[#allocation7 + $0x100] sm:$0xff]
    %v188 = vld [vmem:[#allocation7 + $0x108] sm:$0xff]
    %v189 = vld [vmem:[#allocation7 + $0x110] sm:$0xff]
    %v190 = vld [vmem:[#allocation7 + $0x118] sm:$0xff]
    %v191 = vld [vmem:[#allocation7 + $0x120] sm:$0xff]
    %v192 = vld [vmem:[#allocation7 + $0x128] sm:$0xff]
    %v193 = vld [vmem:[#allocation7 + $0x130] sm:$0xff]
    %v194 = vld [vmem:[#allocation7 + $0x138] sm:$0xff]
    %v195 = vld [vmem:[#allocation7 + $0x140] sm:$0xff]
    %v196 = vld [vmem:[#allocation7 + $0x148] sm:$0xff]
    %v197 = vld [vmem:[#allocation7 + $0x150] sm:$0xff]
    %v198 = vld [vmem:[#allocation7 + $0x158] sm:$0xff]
    %v199 = vld [vmem:[#allocation7 + $0x160] sm:$0xff]
    %v200 = vld [vmem:[#allocation7 + $0x168] sm:$0xff]
    %v201 = vld [vmem:[#allocation7 + $0x170] sm:$0xff]
    %v202 = vld [vmem:[#allocation7 + $0x178] sm:$0xff]
    %v203 = vld [vmem:[%s4] sm:$0x7]
    %v205 = vlaneseq
    %v206 = vshrl.u32 %v205, 7
    %v207 = vsub.s32 0, %v206
    %v208 = vrot.slane %v203, %v207
    %v209 = vlaneseq
    %v210 = vshrl.u32 %v209, 7
    %v211 = vsub.s32 1, %v210
    %v212 = vrot.slane %v203, %v211
    %v213 = vlaneseq
    %v214 = vshrl.u32 %v213, 7
    %v215 = vsub.s32 2, %v214
    %v216 = vrot.slane %v203, %v215
    %220 = vmatprep.subr.mxu0 %v156
    %221 = vmatpush1.msra.mxu0 %v155
    %222 = vmatprep.subr.mxu0 %v159
    %223 = vmatpush1.msra.mxu0 %v158
    %224 = vmatprep.subr.mxu0 %v162
    %225 = vmatpush1.msra.mxu0 %v161
    %226 = vmatprep.subr.mxu0 %v165
    %227 = vmatpush1.msra.mxu0 %v164
    %228 = vmatprep.subr.mxu0 %v168
    %229 = vmatpush1.msra.mxu0 %v167
    %230 = vmatprep.subr.mxu0 %v171
    %231 = vmatpush1.msra.mxu0 %v170
    %232 = vmatprep.subr.mxu0 %v174
    %233 = vmatpush1.msra.mxu0 %v173
    %234 = vmatprep.subr.mxu0 %v177
    %235 = vmatpush1.msra.mxu0 %v176
    %236 = vmatprep.subr.mxu0 %v180
    %237 = vmatpush1.msra.mxu0 %v179
    %238 = vmatprep.subr.mxu0 %v183
    %239 = vmatpush1.msra.mxu0 %v182
    %240 = vmatprep.subr.mxu0 %v186
    %241 = vmatpush1.msra.mxu0 %v185
    %242 = vmatprep.subr.mxu0 %v189
    %243 = vmatpush1.msra.mxu0 %v188
    %244 = vmatprep.subr.mxu0 %v192
    %245 = vmatpush1.msra.mxu0 %v191
    %246 = vmatprep.subr.mxu0 %v195
    %247 = vmatpush1.msra.mxu0 %v194
    %248 = vmatprep.subr.mxu0 %v198
    %249 = vmatpush1.msra.mxu0 %v197
    %250 = vmatprep.subr.mxu0 %v201
    %251 = vmatpush1.msra.mxu0 %v200
    %252 = vmatprep.subr.mxu0 0.0
    %253 = vmatpush1.msra.mxu0 0.0
    %254 = vmatprep.subr.mxu0 0.0
    %255 = vmatpush1.msra.mxu0 0.0
    %256 = vmatprep.subr.mxu0 0.0
    %257 = vmatpush1.msra.mxu0 0.0
    %258 = vmatprep.subr.mxu0 0.0
    %259 = vmatpush1.msra.mxu0 0.0
    %260 = vmatprep.subr.mxu0 0.0
    %261 = vmatpush1.msra.mxu0 0.0
    %262 = vmatprep.subr.mxu0 0.0
    %263 = vmatpush1.msra.mxu0 0.0
    %264 = vmatprep.subr.mxu0 0.0
    %265 = vmatpush1.msra.mxu0 0.0
    %266 = vmatprep.subr.mxu0 0.0
    %267 = vmatpush1.msra.mxu0 0.0
    %268 = vmatprep.subr.mxu0 0.0
    %269 = vmatpush1.msra.mxu0 0.0
    %270 = vmatprep.subr.mxu0 0.0
    %271 = vmatpush1.msra.mxu0 0.0
    %272 = vmatprep.subr.mxu0 0.0
    %273 = vmatpush1.msra.mxu0 0.0
    %274 = vmatprep.subr.mxu0 0.0
    %275 = vmatpush1.msra.mxu0 0.0
    %276 = vmatprep.subr.mxu0 0.0
    %277 = vmatpush1.msra.mxu0 0.0
    %278 = vmatprep.subr.mxu0 0.0
    %279 = vmatpush1.msra.mxu0 0.0
    %280 = vmatprep.subr.mxu0 0.0
    %281 = vmatpush1.msra.mxu0 0.0
    %282 = vmatprep.subr.mxu0 0.0
    %283 = vmatpush1.msra.mxu0 0.0
    %284 = vmatprep.mubr.f32.mxu0 0.0
    %285 = vmatmul.mubr.f32.gmra.mrb[0].mxu0 %v154
    %v286 = vpop.f32.mrb[0].mxu0
    %v287 = vadd.f32 %v208, %v286
    %v288 = vpop.f32.mrb[0].mxu0
    %v289 = vadd.f32 %v212, %v288
    %290 = vdwg.mxu0
    %291 = vmatprep.subr.mxu0 0.0
    %292 = vmatpush1.msra.mxu0 %v157
    %293 = vmatprep.subr.mxu0 0.0
    %294 = vmatpush1.msra.mxu0 %v160
    %295 = vmatprep.subr.mxu0 0.0
    %296 = vmatpush1.msra.mxu0 %v163
    %297 = vmatprep.subr.mxu0 0.0
    %298 = vmatpush1.msra.mxu0 %v166
    %299 = vmatprep.subr.mxu0 0.0
    %300 = vmatpush1.msra.mxu0 %v169
    %301 = vmatprep.subr.mxu0 0.0
    %302 = vmatpush1.msra.mxu0 %v172
    %303 = vmatprep.subr.mxu0 0.0
    %304 = vmatpush1.msra.mxu0 %v175
    %305 = vmatprep.subr.mxu0 0.0
    %306 = vmatpush1.msra.mxu0 %v178
    %307 = vmatprep.subr.mxu0 0.0
    %308 = vmatpush1.msra.mxu0 %v181
    %309 = vmatprep.subr.mxu0 0.0
    %310 = vmatpush1.msra.mxu0 %v184
    %311 = vmatprep.subr.mxu0 0.0
    %312 = vmatpush1.msra.mxu0 %v187
    %313 = vmatprep.subr.mxu0 0.0
    %314 = vmatpush1.msra.mxu0 %v190
    %315 = vmatprep.subr.mxu0 0.0
    %316 = vmatpush1.msra.mxu0 %v193
    %317 = vmatprep.subr.mxu0 0.0
    %318 = vmatpush1.msra.mxu0 %v196
    %319 = vmatprep.subr.mxu0 0.0
    %320 = vmatpush1.msra.mxu0 %v199
    %321 = vmatprep.subr.mxu0 0.0
    %322 = vmatpush1.msra.mxu0 %v202
    %323 = vmatprep.subr.mxu0 0.0
    %324 = vmatpush1.msra.mxu0 0.0
    %325 = vmatprep.subr.mxu0 0.0
    %326 = vmatpush1.msra.mxu0 0.0
    %327 = vmatprep.subr.mxu0 0.0
    %328 = vmatpush1.msra.mxu0 0.0
    %329 = vmatprep.subr.mxu0 0.0
    %330 = vmatpush1.msra.mxu0 0.0
    %331 = vmatprep.subr.mxu0 0.0
    %332 = vmatpush1.msra.mxu0 0.0
    %333 = vmatprep.subr.mxu0 0.0
    %334 = vmatpush1.msra.mxu0 0.0
    %335 = vmatprep.subr.mxu0 0.0
    %336 = vmatpush1.msra.mxu0 0.0
    %337 = vmatprep.subr.mxu0 0.0
    %338 = vmatpush1.msra.mxu0 0.0
    %339 = vmatprep.subr.mxu0 0.0
    %340 = vmatpush1.msra.mxu0 0.0
    %341 = vmatprep.subr.mxu0 0.0
    %342 = vmatpush1.msra.mxu0 0.0
    %343 = vmatprep.subr.mxu0 0.0
    %344 = vmatpush1.msra.mxu0 0.0
    %345 = vmatprep.subr.mxu0 0.0
    %346 = vmatpush1.msra.mxu0 0.0
    %347 = vmatprep.subr.mxu0 0.0
    %348 = vmatpush1.msra.mxu0 0.0
    %349 = vmatprep.subr.mxu0 0.0
    %350 = vmatpush1.msra.mxu0 0.0
    %351 = vmatprep.subr.mxu0 0.0
    %352 = vmatpush1.msra.mxu0 0.0
    %353 = vmatprep.subr.mxu0 0.0
    %354 = vmatpush1.msra.mxu0 0.0
    %355 = vmatprep.mubr.f32.mxu0 0.0
    %356 = vmatmul.mubr.f32.gmra.mrb[0].mxu0 %v154
    %v357 = vpop.f32.mrb[0].mxu0
    %v358 = vadd.f32 %v216, %v357
    %v359 = vpop.f32.mrb[0].mxu0
    %360 = vdwg.mxu0
    %v361 = vmax.f32 %v287, 0.0
    %v362 = vmax.f32 %v289, 0.0
    %v363 = vmax.f32 %v358, 0.0
    %vm364 = vcmp.ne.f32.partialorder %v287, %v287
    %vm365 = vcmp.ne.f32.partialorder %v289, %v289
    %vm366 = vcmp.ne.f32.partialorder %v358, %v358
    %v367 = vadd.f32 %v287, 0.0
    %v368 = vadd.f32 %v289, 0.0
    %v369 = vadd.f32 %v358, 0.0
    %v370 = vand.u32 2147483647, %v287
    %v371 = vand.u32 2147483647, %v289
    %v372 = vand.u32 2147483647, %v358
    %v373 = vsub.f32 0.0, %v370
    %v374 = vsub.f32 0.0, %v371
    %v375 = vsub.f32 0.0, %v372
    %v376 = vmul.f32 %v373, 1.442695
    %v377 = vpow.pop %v376
    %v378 = vmul.f32 %v374, 1.442695
    %v379 = vpow.pop %v378
    %v380 = vmul.f32 %v375, 1.442695
    %v381 = vpow.pop %v380
    %v382 = vadd.f32 %v377, 1.0
    %v383 = vlog2.pop %v382
    %v384 = vmul.f32 %v383, 0.6931472
    %v385 = vmul.f32 -0.5, %v377
    %v386 = vadd.f32 %v385, 1.0
    %v387 = vmul.f32 %v386, %v377
    %v388 = vand.u32 2147483647, %v377
    %vm389 = vcmp.lt.f32.partialorder %v388, 0.0004427343
    %v390 = vsel %vm389, %v387, %v384
    %v391 = vadd.f32 %v379, 1.0
    %v392 = vlog2.pop %v391
    %v393 = vmul.f32 %v392, 0.6931472
    %v394 = vmul.f32 -0.5, %v379
    %v395 = vadd.f32 %v394, 1.0
    %v396 = vmul.f32 %v395, %v379
    %v397 = vand.u32 2147483647, %v379
    %vm398 = vcmp.lt.f32.partialorder %v397, 0.0004427343
    %v399 = vsel %vm398, %v396, %v393
    %v400 = vadd.f32 %v381, 1.0
    %v401 = vlog2.pop %v400
    %v402 = vmul.f32 %v401, 0.6931472
    %v403 = vmul.f32 -0.5, %v381
    %v404 = vadd.f32 %v403, 1.0
    %v405 = vmul.f32 %v404, %v381
    %v406 = vand.u32 2147483647, %v381
    %vm407 = vcmp.lt.f32.partialorder %v406, 0.0004427343
    %v408 = vsel %vm407, %v405, %v402
    %v409 = vadd.f32 %v361, %v390
    %v410 = vadd.f32 %v362, %v399
    %v411 = vadd.f32 %v363, %v408
    %v412 = vsel %vm364, %v367, %v409
    %v413 = vsel %vm365, %v368, %v410
    %v414 = vsel %vm366, %v369, %v411
    %v415 = vadd.f32 %v412, 1.0
    %v416 = vadd.f32 %v413, 1.0
    %v417 = vadd.f32 %v414, 1.0
    %v418 = vsub.f32 %v415, 1.0
    %v419 = vsub.f32 %v416, 1.0
    %v420 = vmul.f32 %v418, %v419
    %v421 = vmul.f32 %v420, 0.125
    %v422 = vadd.f32 %v421, %v415
    %v423 = vadd.f32 %v422, %v416
    %v424 = vsub.f32 %v423, 1.0
    %v425 = vsub.f32 %v424, 1.0
    %v426 = vsub.f32 %v417, 1.0
    %v427 = vmul.f32 %v425, %v426
    %v428 = vmul.f32 %v427, 0.125
    %v429 = vadd.f32 %v428, %v424
    %v430 = vadd.f32 %v429, %v417
    %v431 = vsub.f32 %v430, 1.0
    %432 = vst [vmem:[#allocation8] sm:$0xff] %v415
    %433 = vst [vmem:[#allocation8 + $0x8] sm:$0xff] %v416
    %434 = vst [vmem:[#allocation8 + $0x10] sm:$0xff] %v417
    %435 = vst [vmem:[#allocation8 + $0x18] sm:$0xff] %v431
    // Predicated region
    $region34: #{tpu_custom_call.1} parent=1 // pred_check
      _
    $region35: #{tpu_custom_call.1} parent=1 // pred_check_branch
      %437 = sbr.rel (0) target = $region37
    $region36: #{tpu_custom_call.1} parent=1 // pred_region
      %s439 = ssub.s32 512, 512
      %440 = vsyncadd [#allocation4], %s439
      %s442 = sshll.u32 [#allocation8], 4
      %s443 = int_to_ptr.vmem [resolvable:$true] %s442
      %445 = dma.vmem_to_hbm [thread:$0]  %s443, 512, %s5, [#allocation4]
    $region37: #{tpu_custom_call.1} parent=1 // pred_fallthru
      _
    // Predicated region
    $region38: #{tpu_custom_call.1} parent=1 // pred_check
      _
    $region39: #{tpu_custom_call.1} parent=1 // pred_check_branch
      %447 = sbr.rel (0) target = $region41
    $region40: #{tpu_custom_call.1} parent=1 // pred_region
      %448 = dma.done [#allocation4], 512
    $region41: #{tpu_custom_call.1} parent=1 // pred_fallthru
      _
    %449 = vsyncpa [#allocation3], 1
    %450 = vsyncpa [#allocation6], 1
    %451 = vsyncpa [#allocation4], 1

</llo_original>
